<compile_context>
chip_gen: v7x
topology: tpu7x:2x2x1
jax: 0.10.0
libtpu: 0.0.40
codegen_flags: <defaults>
</compile_context>

<pallas_src>
import math
import jax
import jax.numpy as jnp
from jax.experimental import pallas as pl
from jax.experimental.pallas import tpu as pltpu

# ---------------- model hyperparameters ----------------
D_MODEL = 32
D_FF = 128
DROPOUT = 0.0  # TODO(synk): nn.Dropout treated as identity (eval mode); training-mode
               # parity would need in-kernel pltpu.prng_seed / prng_random_bits.

_COL_TILE = 1024  # lane-axis tile over the folded B*S dimension


def _ffn_kernel(xt_ref, w1_ref, b1_ref, w2_ref, b2_ref, ot_ref):
    # xt_ref: (d_model, tn)   bf16 -- lane-dense column block of x^T
    # w1_ref: (d_ff, d_model) bf16 -- torch linear_1.weight (untransposed)
    # b1_ref: (d_ff, 1)       f32
    # w2_ref: (d_model, d_ff) bf16 -- torch linear_2.weight (untransposed)
    # b2_ref: (d_model, 1)    f32
    # ot_ref: (d_model, tn)   f32  -- lane-dense column block of y^T
    h = jnp.dot(w1_ref[...], xt_ref[...], preferred_element_type=jnp.float32)
    h = jnp.maximum(h + b1_ref[...], 0.0)
    # dropout = identity (eval mode)
    y = jnp.dot(w2_ref[...], h.astype(w2_ref.dtype),
                preferred_element_type=jnp.float32)
    ot_ref[...] = (y + b2_ref[...]).astype(ot_ref.dtype)


def _pick_col_tile(rows: int) -> int:
    # Fixed lane-dense tile -> many grid steps when the problem is big;
    # single block when it is small (splitting tiny work only adds the
    # ~0.35 us per-step overhead on single-TC chips).
    for tn in (_COL_TILE, 512, 256, 128):
        if rows % tn == 0 and rows // tn >= 2:
            return tn
    return rows


def feed_forward(x, w1, b1, w2, b2):
    """x: (B, S, d_model); w1: (d_ff, d_model); b1: (d_ff,);
       w2: (d_model, d_ff); b2: (d_model,)  -- torch nn.Linear conventions."""
    B, S, D = x.shape
    d_ff = w1.shape[0]
    rows = B * S

    # Lane-dense layout: fold (B, S) and put the big axis on the lane dim.
    xt = x.reshape(rows, D).T.astype(jnp.bfloat16)       # (d_model, rows)
    w1b = w1.astype(jnp.bfloat16)                         # (d_ff, d_model)
    w2b = w2.astype(jnp.bfloat16)                         # (d_model, d_ff)
    b1c = b1.reshape(d_ff, 1).astype(jnp.float32)
    b2c = b2.reshape(D, 1).astype(jnp.float32)

    tn = _pick_col_tile(rows)
    grid = (rows // tn,)

    yt = pl.pallas_call(
        _ffn_kernel,
        out_shape=jax.ShapeDtypeStruct((D, rows), jnp.float32),
        grid_spec=pltpu.PrefetchScalarGridSpec(
            num_scalar_prefetch=0,
            grid=grid,
            in_specs=[
                # x^T column block (double-buffered by default)
                pl.BlockSpec((D, tn), lambda i: (0, i)),
                # grid-invariant operands: resident, single buffer
                pl.BlockSpec((d_ff, D), lambda i: (0, 0),
                             pipeline_mode=pl.Buffered(1)),
                pl.BlockSpec((d_ff, 1), lambda i: (0, 0),
                             pipeline_mode=pl.Buffered(1)),
                pl.BlockSpec((D, d_ff), lambda i: (0, 0),
                             pipeline_mode=pl.Buffered(1)),
                pl.BlockSpec((D, 1), lambda i: (0, 0),
                             pipeline_mode=pl.Buffered(1)),
            ],
            out_specs=pl.BlockSpec((D, tn), lambda i: (0, i)),
        ),
        compiler_params=pltpu.CompilerParams(
            dimension_semantics=("parallel",),
            vmem_limit_bytes=32 * 1024 * 1024,
        ),
    )(xt, w1b, b1c, w2b, b2c)

    # Untranspose outside the kernel (fuseable into the consuming op).
    return yt.T.reshape(B, S, D).astype(x.dtype)


def _reference(x, w1, b1, w2, b2):
    # pure-JAX f32 reference mirroring the PyTorch forward (dropout = identity)
    h = jnp.maximum(x @ w1.T + b1, 0.0)
    return h @ w2.T + b2


if __name__ == "__main__":
    B, S = 2, 8
    key = jax.random.PRNGKey(0)
    ks = jax.random.split(key, 5)

    # deterministic parameter init mimicking nn.Linear defaults (synthetic)
    s1 = 1.0 / math.sqrt(D_MODEL)
    s2 = 1.0 / math.sqrt(D_FF)
    w1 = jax.random.uniform(ks[0], (D_FF, D_MODEL), jnp.float32, -s1, s1)
    b1 = jax.random.uniform(ks[1], (D_FF,), jnp.float32, -s1, s1)
    w2 = jax.random.uniform(ks[2], (D_MODEL, D_FF), jnp.float32, -s2, s2)
    b2 = jax.random.uniform(ks[3], (D_MODEL,), jnp.float32, -s2, s2)

    x = jax.random.normal(ks[4], (B, S, D_MODEL), jnp.float32)

    out = jax.block_until_ready(feed_forward(x, w1, b1, w2, b2))
    ref = _reference(x, w1, b1, w2, b2)

    assert out.shape == (B, S, D_MODEL)
    # bf16 operands with f32 accumulation -> relaxed tolerance vs the f32 reference
    assert jnp.allclose(out, ref, atol=2e-2, rtol=2e-2), "mismatch vs JAX reference"

    print("KERNEL_OK")
</pallas_src>

<mosaic_0001>
module attributes {stable_mosaic.version = 11 : i64} {
  func.func @_ffn_kernel(%arg0: i32, %arg1: memref<32x16xbf16, #tpu.memory_space<vmem>>, %arg2: memref<128x32xbf16, #tpu.memory_space<vmem>>, %arg3: memref<128x1xf32, #tpu.memory_space<vmem>>, %arg4: memref<32x128xbf16, #tpu.memory_space<vmem>>, %arg5: memref<32x1xf32, #tpu.memory_space<vmem>>, %arg6: memref<32x16xf32, #tpu.memory_space<vmem>>) attributes {dimension_semantics = [#tpu.dimension_semantics<parallel>], iteration_bounds = array<i64: 1>, scalar_prefetch = 0 : i64, scratch_operands = 0 : i64, tpu.core_type = #tpu.core_type<tc>, window_params = [{transform_indices = @transform_0, window_bounds = array<i64: 32, 16>}, {pipeline_mode = #tpu.pipeline_mode<synchronous>, transform_indices = @transform_1, window_bounds = array<i64: 128, 32>}, {pipeline_mode = #tpu.pipeline_mode<synchronous>, transform_indices = @transform_2, window_bounds = array<i64: 128, 1>}, {pipeline_mode = #tpu.pipeline_mode<synchronous>, transform_indices = @transform_3, window_bounds = array<i64: 32, 128>}, {pipeline_mode = #tpu.pipeline_mode<synchronous>, transform_indices = @transform_4, window_bounds = array<i64: 32, 1>}, {transform_indices = @transform_5, window_bounds = array<i64: 32, 16>}]} {
    %c0 = arith.constant 0 : index
    %c0_0 = arith.constant 0 : index
    %0 = vector.load %arg2[%c0, %c0_0] : memref<128x32xbf16, #tpu.memory_space<vmem>>, vector<128x32xbf16>
    %c0_1 = arith.constant 0 : index
    %c0_2 = arith.constant 0 : index
    %1 = vector.load %arg1[%c0_1, %c0_2] : memref<32x16xbf16, #tpu.memory_space<vmem>>, vector<32x16xbf16>
    %cst = arith.constant dense<0.000000e+00> : vector<128x16xf32>
    %2 = tpu.matmul %0, %1, %cst {dimension_numbers = #tpu.dot_dimension_numbers<[1], [0], [0], [1], [0, 0, 1, 1], [], []>} : vector<128x32xbf16>, vector<32x16xbf16>, vector<128x16xf32> -> vector<128x16xf32>
    %c0_3 = arith.constant 0 : index
    %c0_4 = arith.constant 0 : index
    %3 = vector.load %arg3[%c0_3, %c0_4] : memref<128x1xf32, #tpu.memory_space<vmem>>, vector<128x1xf32>
    %4 = vector.broadcast %3 : vector<128x1xf32> to vector<128x16xf32>
    %5 = arith.addf %2, %4 : vector<128x16xf32>
    %cst_5 = arith.constant 0.000000e+00 : f32
    %6 = vector.broadcast %cst_5 : f32 to vector<128x16xf32>
    %7 = arith.maximumf %5, %6 : vector<128x16xf32>
    %c0_6 = arith.constant 0 : index
    %c0_7 = arith.constant 0 : index
    %8 = vector.load %arg4[%c0_6, %c0_7] : memref<32x128xbf16, #tpu.memory_space<vmem>>, vector<32x128xbf16>
    %9 = arith.truncf %7 : vector<128x16xf32> to vector<128x16xbf16>
    %cst_8 = arith.constant dense<0.000000e+00> : vector<32x16xf32>
    %10 = tpu.matmul %8, %9, %cst_8 {dimension_numbers = #tpu.dot_dimension_numbers<[1], [0], [0], [1], [0, 0, 1, 1], [], []>} : vector<32x128xbf16>, vector<128x16xbf16>, vector<32x16xf32> -> vector<32x16xf32>
    %c0_9 = arith.constant 0 : index
    %c0_10 = arith.constant 0 : index
    %11 = vector.load %arg5[%c0_9, %c0_10] : memref<32x1xf32, #tpu.memory_space<vmem>>, vector<32x1xf32>
    %12 = vector.broadcast %11 : vector<32x1xf32> to vector<32x16xf32>
    %13 = arith.addf %10, %12 : vector<32x16xf32>
    %c0_11 = arith.constant 0 : index
    %c0_12 = arith.constant 0 : index
    %14 = vector.load %arg6[%c0_11, %c0_12] : memref<32x16xf32, #tpu.memory_space<vmem>>, vector<32x16xf32>
    tpu.vector_store %arg6[%c0_11, %c0_12], %13 {strides = array<i32>} : memref<32x16xf32, #tpu.memory_space<vmem>>, vector<32x16xf32>,
    return
  }
  func.func @transform_0(%arg0: i32) -> (i32, i32) {
    %c0_i32 = arith.constant 0 : i32
    %c0_i32_0 = arith.constant 0 : i32
    return %c0_i32, %arg0 : i32, i32
  }
  func.func @transform_1(%arg0: i32) -> (i32, i32) {
    %c0_i32 = arith.constant 0 : i32
    %c0_i32_0 = arith.constant 0 : i32
    %c0_i32_1 = arith.constant 0 : i32
    return %c0_i32, %c0_i32_0 : i32, i32
  }
  func.func @transform_2(%arg0: i32) -> (i32, i32) {
    %c0_i32 = arith.constant 0 : i32
    %c0_i32_0 = arith.constant 0 : i32
    %c0_i32_1 = arith.constant 0 : i32
    return %c0_i32, %c0_i32_0 : i32, i32
  }
  func.func @transform_3(%arg0: i32) -> (i32, i32) {
    %c0_i32 = arith.constant 0 : i32
    %c0_i32_0 = arith.constant 0 : i32
    %c0_i32_1 = arith.constant 0 : i32
    return %c0_i32, %c0_i32_0 : i32, i32
  }
  func.func @transform_4(%arg0: i32) -> (i32, i32) {
    %c0_i32 = arith.constant 0 : i32
    %c0_i32_0 = arith.constant 0 : i32
    %c0_i32_1 = arith.constant 0 : i32
    return %c0_i32, %c0_i32_0 : i32, i32
  }
  func.func @transform_5(%arg0: i32) -> (i32, i32) {
    %c0_i32 = arith.constant 0 : i32
    %c0_i32_0 = arith.constant 0 : i32
    return %c0_i32, %arg0 : i32, i32
  }
}

</mosaic_0001>

<llo_original>
// kernel: tpu_custom_call.1
$region0: #{tpu_custom_call.1}
  #allocation0 [shape = 'u32[]', space=smem, size = 0x4, offset = 0x4, fixed_abs, tag = 'smem constant byte address 0x4 - core index']
  #allocation1 [shape = 'u32[144,128]{1,0:T(1,128)}', space=vmem, size = 0x12000, scoped, tag = 'internal scratch']
  %s0 = inlined_call_operand.vmem [shape: bf16[32,16], index: 0, kind: input, shape index: {}]
  %s1 = inlined_call_operand.vmem [shape: bf16[128,32], index: 1, kind: input, shape index: {}]
  %s2 = inlined_call_operand.vmem [shape: f32[128,1], index: 2, kind: input, shape index: {}]
  %s3 = inlined_call_operand.vmem [shape: bf16[32,128], index: 3, kind: input, shape index: {}]
  %s4 = inlined_call_operand.vmem [shape: f32[32,1], index: 4, kind: input, shape index: {}]
  %s5 = inlined_call_operand.vmem [shape: f32[32,16], index: 5, kind: output, shape index: {}]
  %s6 = sld [smem:[#allocation0]]
  $region30: #{tpu_custom_call.1} parent=0
    _
  %s8 = ssub.s32 1, %s6
  %s9 = scalar_select 0, %s8, %s6
  // Predicated region
  $region2: #{tpu_custom_call.1} parent=0 // pred_check
    _
  $region3: #{tpu_custom_call.1} parent=0 // pred_check_branch
    %11 = sbr.rel (0) target = $region5
  $region4: #{tpu_custom_call.1} parent=0 // pred_region
    _
  $region5: #{tpu_custom_call.1} parent=0 // pred_fallthru
    _
  // Predicated region
  $region6: #{tpu_custom_call.1} parent=0 // pred_check
    _
  $region7: #{tpu_custom_call.1} parent=0 // pred_check_branch
    %13 = sbr.rel (0) target = $region9
  $region8: #{tpu_custom_call.1} parent=0 // pred_region
    _
  $region9: #{tpu_custom_call.1} parent=0 // pred_fallthru
    _
  // Predicated region
  $region10: #{tpu_custom_call.1} parent=0 // pred_check
    _
  $region11: #{tpu_custom_call.1} parent=0 // pred_check_branch
    %15 = sbr.rel (0) target = $region13
  $region12: #{tpu_custom_call.1} parent=0 // pred_region
    _
  $region13: #{tpu_custom_call.1} parent=0 // pred_fallthru
    _
  // Predicated region
  $region14: #{tpu_custom_call.1} parent=0 // pred_check
    _
  $region15: #{tpu_custom_call.1} parent=0 // pred_check_branch
    %17 = sbr.rel (0) target = $region17
  $region16: #{tpu_custom_call.1} parent=0 // pred_region
    _
  $region17: #{tpu_custom_call.1} parent=0 // pred_fallthru
    _
  // Predicated region
  $region18: #{tpu_custom_call.1} parent=0 // pred_check
    _
  $region19: #{tpu_custom_call.1} parent=0 // pred_check_branch
    %19 = sbr.rel (0) target = $region21
  $region20: #{tpu_custom_call.1} parent=0 // pred_region
    _
  $region21: #{tpu_custom_call.1} parent=0 // pred_fallthru
    _
  %v21 = vld [vmem:[%s1] sm:$0xf]
  %v22 = vld [vmem:[%s1 + $0x4] sm:$0xf]
  %v23 = vld [vmem:[%s1 + $0x8] sm:$0xf]
  %v24 = vld [vmem:[%s1 + $0xc] sm:$0xf]
  %v25 = vld [vmem:[%s1 + $0x10] sm:$0xf]
  %v26 = vld [vmem:[%s1 + $0x14] sm:$0xf]
  %v27 = vld [vmem:[%s1 + $0x18] sm:$0xf]
  %v28 = vld [vmem:[%s1 + $0x1c] sm:$0xf]
  %v29 = vld [vmem:[%s1 + $0x20] sm:$0xf]
  %v30 = vld [vmem:[%s1 + $0x24] sm:$0xf]
  %v31 = vld [vmem:[%s1 + $0x28] sm:$0xf]
  %v32 = vld [vmem:[%s1 + $0x2c] sm:$0xf]
  %v33 = vld [vmem:[%s1 + $0x30] sm:$0xf]
  %v34 = vld [vmem:[%s1 + $0x34] sm:$0xf]
  %v35 = vld [vmem:[%s1 + $0x38] sm:$0xf]
  %v36 = vld [vmem:[%s1 + $0x3c] sm:$0xf]
  %v37 = vld [vmem:[%s0] sm:$0xf]
  %v38 = vld [vmem:[%s0 + $0x4] sm:$0xf]
  %v39 = vld [vmem:[%s0 + $0x8] sm:$0xf]
  %v40 = vld [vmem:[%s0 + $0xc] sm:$0xf]
  %v41 = vld [vmem:[%s2] sm:$0xff]
  %v42 = vld [vmem:[%s2 + $0x8] sm:$0xff]
  %v43 = vld [vmem:[%s2 + $0x10] sm:$0xff]
  %v44 = vld [vmem:[%s2 + $0x18] sm:$0xff]
  %v45 = vld [vmem:[%s2 + $0x20] sm:$0xff]
  %v46 = vld [vmem:[%s2 + $0x28] sm:$0xff]
  %v47 = vld [vmem:[%s2 + $0x30] sm:$0xff]
  %v48 = vld [vmem:[%s2 + $0x38] sm:$0xff]
  %v49 = vld [vmem:[%s2 + $0x40] sm:$0xff]
  %v50 = vld [vmem:[%s2 + $0x48] sm:$0xff]
  %v51 = vld [vmem:[%s2 + $0x50] sm:$0xff]
  %v52 = vld [vmem:[%s2 + $0x58] sm:$0xff]
  %v53 = vld [vmem:[%s2 + $0x60] sm:$0xff]
  %v54 = vld [vmem:[%s2 + $0x68] sm:$0xff]
  %v55 = vld [vmem:[%s2 + $0x70] sm:$0xff]
  %v56 = vld [vmem:[%s2 + $0x78] sm:$0xff]
  %58 = vset.pattern.permute.xlu0 0
  %59 = vperm.xlu0 %58, %v41
  %v60 = vpop.permute.xlu0 %59
  %63 = vset.pattern.permute.xlu0 0
  %64 = vperm.xlu0 %63, %v42
  %v65 = vpop.permute.xlu0 %64
  %68 = vset.pattern.permute.xlu0 0
  %69 = vperm.xlu0 %68, %v43
  %v70 = vpop.permute.xlu0 %69
  %73 = vset.pattern.permute.xlu0 0
  %74 = vperm.xlu0 %73, %v44
  %v75 = vpop.permute.xlu0 %74
  %78 = vset.pattern.permute.xlu0 0
  %79 = vperm.xlu0 %78, %v45
  %v80 = vpop.permute.xlu0 %79
  %83 = vset.pattern.permute.xlu0 0
  %84 = vperm.xlu0 %83, %v46
  %v85 = vpop.permute.xlu0 %84
  %88 = vset.pattern.permute.xlu0 0
  %89 = vperm.xlu0 %88, %v47
  %v90 = vpop.permute.xlu0 %89
  %93 = vset.pattern.permute.xlu0 0
  %94 = vperm.xlu0 %93, %v48
  %v95 = vpop.permute.xlu0 %94
  %98 = vset.pattern.permute.xlu0 0
  %99 = vperm.xlu0 %98, %v49
  %v100 = vpop.permute.xlu0 %99
  %103 = vset.pattern.permute.xlu0 0
  %104 = vperm.xlu0 %103, %v50
  %v105 = vpop.permute.xlu0 %104
  %108 = vset.pattern.permute.xlu0 0
  %109 = vperm.xlu0 %108, %v51
  %v110 = vpop.permute.xlu0 %109
  %113 = vset.pattern.permute.xlu0 0
  %114 = vperm.xlu0 %113, %v52
  %v115 = vpop.permute.xlu0 %114
  %118 = vset.pattern.permute.xlu0 0
  %119 = vperm.xlu0 %118, %v53
  %v120 = vpop.permute.xlu0 %119
  %123 = vset.pattern.permute.xlu0 0
  %124 = vperm.xlu0 %123, %v54
  %v125 = vpop.permute.xlu0 %124
  %128 = vset.pattern.permute.xlu0 0
  %129 = vperm.xlu0 %128, %v55
  %v130 = vpop.permute.xlu0 %129
  %133 = vset.pattern.permute.xlu0 0
  %134 = vperm.xlu0 %133, %v56
  %v135 = vpop.permute.xlu0 %134
  %v153 = vunpack.c.l.b16 %v21
  %v154 = vunpack.c.l.b16 %v22
  %v155 = vunpack.c.l.b16 %v23
  %v156 = vunpack.c.l.b16 %v24
  %v157 = vunpack.c.l.b16 %v25
  %v158 = vunpack.c.l.b16 %v26
  %v159 = vunpack.c.l.b16 %v27
  %v160 = vunpack.c.l.b16 %v28
  %v161 = vunpack.c.l.b16 %v29
  %v162 = vunpack.c.l.b16 %v30
  %v163 = vunpack.c.l.b16 %v31
  %v164 = vunpack.c.l.b16 %v32
  %v165 = vunpack.c.l.b16 %v33
  %v166 = vunpack.c.l.b16 %v34
  %v167 = vunpack.c.l.b16 %v35
  %v168 = vunpack.c.l.b16 %v36
  %v169 = vpack.c.b16 %v154, %v153
  %v170 = vpack.c.b16 %v156, %v155
  %v171 = vpack.c.b16 %v158, %v157
  %v172 = vpack.c.b16 %v160, %v159
  %v173 = vpack.c.b16 %v162, %v161
  %v174 = vpack.c.b16 %v164, %v163
  %v175 = vpack.c.b16 %v166, %v165
  %v176 = vpack.c.b16 %v168, %v167
  %v181 = vunpack.c.l.b16 %v37
  %v182 = vunpack.c.l.b16 %v38
  %v183 = vunpack.c.l.b16 %v39
  %v184 = vunpack.c.l.b16 %v40
  %v185 = vpack.c.b16 %v182, %v181
  %v186 = vpack.c.b16 %v184, %v183
  %vm189 = vcmask 261120
  %v191 = vsel %vm189, %v169, 0
  %v194 = vsel %vm189, %v170, 0
  %v197 = vsel %vm189, %v171, 0
  %v200 = vsel %vm189, %v172, 0
  %v203 = vsel %vm189, %v173, 0
  %v206 = vsel %vm189, %v174, 0
  %v209 = vsel %vm189, %v175, 0
  %v212 = vsel %vm189, %v176, 0
  %214 = vmatprep.subr.bf16.mxu0 0
  %215 = vmatpush1.bf16.msra.mxu0 %v185
  %216 = vmatprep.subr.bf16.mxu0 0
  %217 = vmatpush1.bf16.msra.mxu0 %v186
  %218 = vmatprep.subr.bf16.mxu0 0
  %219 = vmatpush1.bf16.msra.mxu0 0
  %220 = vmatprep.subr.bf16.mxu0 0
  %221 = vmatpush1.bf16.msra.mxu0 0
  %222 = vmatprep.subr.bf16.mxu0 0
  %223 = vmatpush1.bf16.msra.mxu0 0
  %224 = vmatprep.subr.bf16.mxu0 0
  %225 = vmatpush1.bf16.msra.mxu0 0
  %226 = vmatprep.subr.bf16.mxu0 0
  %227 = vmatpush1.bf16.msra.mxu0 0
  %228 = vmatprep.subr.bf16.mxu0 0
  %229 = vmatpush1.bf16.msra.mxu0 0
  %230 = vmatprep.subr.bf16.mxu0 0
  %231 = vmatpush1.bf16.msra.mxu0 0
  %232 = vmatprep.subr.bf16.mxu0 0
  %233 = vmatpush1.bf16.msra.mxu0 0
  %234 = vmatprep.subr.bf16.mxu0 0
  %235 = vmatpush1.bf16.msra.mxu0 0
  %236 = vmatprep.subr.bf16.mxu0 0
  %237 = vmatpush1.bf16.msra.mxu0 0
  %238 = vmatprep.subr.bf16.mxu0 0
  %239 = vmatpush1.bf16.msra.mxu0 0
  %240 = vmatprep.subr.bf16.mxu0 0
  %241 = vmatpush1.bf16.msra.mxu0 0
  %242 = vmatprep.subr.bf16.mxu0 0
  %243 = vmatpush1.bf16.msra.mxu0 0
  %244 = vmatprep.subr.bf16.mxu0 0
  %245 = vmatpush1.bf16.msra.mxu0 0
  %246 = vmatprep.mubr.bf16.mxu0 0
  %247 = vmatmul.mubr.bf16.gmra.mrb[0].mxu0 %v191
  %v248 = vpop.f32.mrb[0].mxu0
  %v249 = vadd.f32 %v60, %v248
  %v250 = vpop.f32.mrb[0].mxu0
  %v251 = vpop.f32.mrb[0].mxu0
  %v252 = vadd.f32 %v65, %v251
  %v253 = vpop.f32.mrb[0].mxu0
  %254 = vmatprep.mubr.bf16.mxu0 0
  %255 = vmatmul.mubr.bf16.gmra.mrb[0].mxu0 %v194
  %v256 = vpop.f32.mrb[0].mxu0
  %v257 = vadd.f32 %v70, %v256
  %v258 = vpop.f32.mrb[0].mxu0
  %v259 = vpop.f32.mrb[0].mxu0
  %v260 = vadd.f32 %v75, %v259
  %v261 = vpop.f32.mrb[0].mxu0
  %262 = vmatprep.mubr.bf16.mxu0 0
  %263 = vmatmul.mubr.bf16.gmra.mrb[0].mxu0 %v197
  %v264 = vpop.f32.mrb[0].mxu0
  %v265 = vadd.f32 %v80, %v264
  %v266 = vpop.f32.mrb[0].mxu0
  %v267 = vpop.f32.mrb[0].mxu0
  %v268 = vadd.f32 %v85, %v267
  %v269 = vpop.f32.mrb[0].mxu0
  %270 = vmatprep.mubr.bf16.mxu0 0
  %271 = vmatmul.mubr.bf16.gmra.mrb[0].mxu0 %v200
  %v272 = vpop.f32.mrb[0].mxu0
  %v273 = vadd.f32 %v90, %v272
  %v274 = vpop.f32.mrb[0].mxu0
  %v275 = vpop.f32.mrb[0].mxu0
  %v276 = vadd.f32 %v95, %v275
  %v277 = vpop.f32.mrb[0].mxu0
  %278 = vmatprep.mubr.bf16.mxu0 0
  %279 = vmatmul.mubr.bf16.gmra.mrb[0].mxu0 %v203
  %v280 = vpop.f32.mrb[0].mxu0
  %v281 = vadd.f32 %v100, %v280
  %v282 = vpop.f32.mrb[0].mxu0
  %v283 = vpop.f32.mrb[0].mxu0
  %v284 = vadd.f32 %v105, %v283
  %v285 = vpop.f32.mrb[0].mxu0
  %286 = vmatprep.mubr.bf16.mxu0 0
  %287 = vmatmul.mubr.bf16.gmra.mrb[0].mxu0 %v206
  %v288 = vpop.f32.mrb[0].mxu0
  %v289 = vadd.f32 %v110, %v288
  %v290 = vpop.f32.mrb[0].mxu0
  %v291 = vpop.f32.mrb[0].mxu0
  %v292 = vadd.f32 %v115, %v291
  %v293 = vpop.f32.mrb[0].mxu0
  %294 = vmatprep.mubr.bf16.mxu0 0
  %295 = vmatmul.mubr.bf16.gmra.mrb[0].mxu0 %v209
  %v296 = vpop.f32.mrb[0].mxu0
  %v297 = vadd.f32 %v120, %v296
  %v298 = vpop.f32.mrb[0].mxu0
  %v299 = vpop.f32.mrb[0].mxu0
  %v300 = vadd.f32 %v125, %v299
  %v301 = vpop.f32.mrb[0].mxu0
  %302 = vmatprep.mubr.bf16.mxu0 0
  %303 = vmatmul.mubr.bf16.gmra.mrb[0].mxu0 %v212
  %v304 = vpop.f32.mrb[0].mxu0
  %v305 = vadd.f32 %v130, %v304
  %v306 = vpop.f32.mrb[0].mxu0
  %v307 = vpop.f32.mrb[0].mxu0
  %v308 = vadd.f32 %v135, %v307
  %v309 = vpop.f32.mrb[0].mxu0
  %310 = vdwg.mxu0
  %v311 = vmax.f32 %v249, 0.0
  %v312 = vmax.f32 %v252, 0.0
  %v313 = vmax.f32 %v257, 0.0
  %v314 = vmax.f32 %v260, 0.0
  %v315 = vmax.f32 %v265, 0.0
  %v316 = vmax.f32 %v268, 0.0
  %v317 = vmax.f32 %v273, 0.0
  %v318 = vmax.f32 %v276, 0.0
  %v319 = vmax.f32 %v281, 0.0
  %v320 = vmax.f32 %v284, 0.0
  %v321 = vmax.f32 %v289, 0.0
  %v322 = vmax.f32 %v292, 0.0
  %v323 = vmax.f32 %v297, 0.0
  %v324 = vmax.f32 %v300, 0.0
  %v325 = vmax.f32 %v305, 0.0
  %v326 = vmax.f32 %v308, 0.0
  %v327 = vld [vmem:[%s3] sm:$0xf]
  %v328 = vld [vmem:[%s3 + $0x4] sm:$0xf]
  %v329 = vld [vmem:[%s3 + $0x8] sm:$0xf]
  %v330 = vld [vmem:[%s3 + $0xc] sm:$0xf]
  %v331 = vpack.c.bf16 %v312, %v311
  %v332 = vpack.c.bf16 %v314, %v313
  %v333 = vpack.c.bf16 %v316, %v315
  %v334 = vpack.c.bf16 %v318, %v317
  %v335 = vpack.c.bf16 %v320, %v319
  %v336 = vpack.c.bf16 %v322, %v321
  %v337 = vpack.c.bf16 %v324, %v323
  %v338 = vpack.c.bf16 %v326, %v325
  %v339 = vld [vmem:[%s4] sm:$0xff]
  %v340 = vld [vmem:[%s4 + $0x8] sm:$0xff]
  %v341 = vld [vmem:[%s4 + $0x10] sm:$0xff]
  %v342 = vld [vmem:[%s4 + $0x18] sm:$0xff]
  %344 = vset.pattern.permute.xlu0 0
  %345 = vperm.xlu0 %344, %v339
  %v346 = vpop.permute.xlu0 %345
  %349 = vset.pattern.permute.xlu0 0
  %350 = vperm.xlu0 %349, %v340
  %v351 = vpop.permute.xlu0 %350
  %354 = vset.pattern.permute.xlu0 0
  %355 = vperm.xlu0 %354, %v341
  %v356 = vpop.permute.xlu0 %355
  %359 = vset.pattern.permute.xlu0 0
  %360 = vperm.xlu0 %359, %v342
  %v361 = vpop.permute.xlu0 %360
  %v367 = vunpack.c.l.b16 %v327
  %v368 = vunpack.c.l.b16 %v328
  %v369 = vunpack.c.l.b16 %v329
  %v370 = vunpack.c.l.b16 %v330
  %v371 = vpack.c.b16 %v368, %v367
  %v372 = vpack.c.b16 %v370, %v369
  %375 = vmatprep.subr.bf16.mxu0 0
  %376 = vmatpush1.bf16.msra.mxu0 %v331
  %377 = vmatprep.subr.bf16.mxu0 0
  %378 = vmatpush1.bf16.msra.mxu0 %v332
  %379 = vmatprep.subr.bf16.mxu0 0
  %380 = vmatpush1.bf16.msra.mxu0 %v333
  %381 = vmatprep.subr.bf16.mxu0 0
  %382 = vmatpush1.bf16.msra.mxu0 %v334
  %383 = vmatprep.subr.bf16.mxu0 0
  %384 = vmatpush1.bf16.msra.mxu0 %v335
  %385 = vmatprep.subr.bf16.mxu0 0
  %386 = vmatpush1.bf16.msra.mxu0 %v336
  %387 = vmatprep.subr.bf16.mxu0 0
  %388 = vmatpush1.bf16.msra.mxu0 %v337
  %389 = vmatprep.subr.bf16.mxu0 0
  %390 = vmatpush1.bf16.msra.mxu0 %v338
  %391 = vmatprep.subr.bf16.mxu0 0
  %392 = vmatpush1.bf16.msra.mxu0 0
  %393 = vmatprep.subr.bf16.mxu0 0
  %394 = vmatpush1.bf16.msra.mxu0 0
  %395 = vmatprep.subr.bf16.mxu0 0
  %396 = vmatpush1.bf16.msra.mxu0 0
  %397 = vmatprep.subr.bf16.mxu0 0
  %398 = vmatpush1.bf16.msra.mxu0 0
  %399 = vmatprep.subr.bf16.mxu0 0
  %400 = vmatpush1.bf16.msra.mxu0 0
  %401 = vmatprep.subr.bf16.mxu0 0
  %402 = vmatpush1.bf16.msra.mxu0 0
  %403 = vmatprep.subr.bf16.mxu0 0
  %404 = vmatpush1.bf16.msra.mxu0 0
  %405 = vmatprep.subr.bf16.mxu0 0
  %406 = vmatpush1.bf16.msra.mxu0 0
  %407 = vmatprep.mubr.bf16.mxu0 0
  %408 = vmatmul.mubr.bf16.gmra.mrb[0].mxu0 %v371
  %v409 = vpop.f32.mrb[0].mxu0
  %v410 = vadd.f32 %v346, %v409
  %v411 = vpop.f32.mrb[0].mxu0
  %v412 = vpop.f32.mrb[0].mxu0
  %v413 = vadd.f32 %v351, %v412
  %v414 = vpop.f32.mrb[0].mxu0
  %415 = vmatprep.mubr.bf16.mxu0 0
  %416 = vmatmul.mubr.bf16.gmra.mrb[0].mxu0 %v372
  %v417 = vpop.f32.mrb[0].mxu0
  %v418 = vadd.f32 %v356, %v417
  %v419 = vpop.f32.mrb[0].mxu0
  %v420 = vpop.f32.mrb[0].mxu0
  %v421 = vadd.f32 %v361, %v420
  %v422 = vpop.f32.mrb[0].mxu0
  %423 = vdwg.mxu0
  %vm424 = vcmask 130048
  %425 = vst.msk [vmem:[%s5] sm:$0xff] %vm424, %v410
  %426 = vst.msk [vmem:[%s5 + $0x8] sm:$0xff] %vm424, %v413
  %427 = vst.msk [vmem:[%s5 + $0x10] sm:$0xff] %vm424, %v418
  %428 = vst.msk [vmem:[%s5 + $0x18] sm:$0xff] %vm424, %v421
  // Predicated region
  $region22: #{tpu_custom_call.1} parent=0 // pred_check
    _
  $region23: #{tpu_custom_call.1} parent=0 // pred_check_branch
    %430 = sbr.rel (0) target = $region25
  $region24: #{tpu_custom_call.1} parent=0 // pred_region
    _
  $region25: #{tpu_custom_call.1} parent=0 // pred_fallthru
    _
  // Predicated region
  $region26: #{tpu_custom_call.1} parent=0 // pred_check
    _
  $region27: #{tpu_custom_call.1} parent=0 // pred_check_branch
    %432 = sbr.rel (0) target = $region29
  $region28: #{tpu_custom_call.1} parent=0 // pred_region
    _
  $region29: #{tpu_custom_call.1} parent=0 // pred_fallthru
    _

</llo_original>
